<compile_context>
chip_gen: v7x
topology: tpu7x:2x2x1
jax: 0.10.0
libtpu: 0.0.40
codegen_flags: <defaults>
</compile_context>

<pallas_src>
import functools
import numpy as np
import jax
import jax.numpy as jnp
from jax.experimental import pallas as pl
from jax.experimental.pallas import tpu as pltpu

# ----------------------------- configuration -------------------------------
BATCH = 2
WINDOW = 256          # window_size (small stand-in for 2048)
HOP = 64              # hop_size
N_MELS = 32
SR = 22050
N_CLASSES = 10
N_CLASSES_PAD = 128   # lane-dense head output, sliced back to N_CLASSES
T_SAMPLES = 1024
N_FRAMES = (T_SAMPLES - WINDOW) // HOP + 1
N_BINS = WINDOW // 2 + 1
BN_EPS = 1e-5
BN_SCALE = float(1.0 / np.sqrt(1.0 + BN_EPS))   # eval-mode BN, default stats

_CPARAMS = pltpu.CompilerParams(dimension_semantics=("arbitrary",))


# ------------------------------ Pallas kernels ------------------------------
def _mel_frontend_kernel(frames_ref, cosw_ref, sinw_ref, melw_ref, p_ref, o_ref):
    """Fused mel front-end: STFT power -> mel -> pow(sigmoid(a)) -> BN2d(1)."""
    f = frames_ref[...]                                             # (B*F, window)
    c = jnp.dot(f, cosw_ref[...], preferred_element_type=jnp.float32)
    s = jnp.dot(f, sinw_ref[...], preferred_element_type=jnp.float32)
    stft = c * c + s * s                                            # (B*F, n_bins)
    mel = jnp.dot(stft, melw_ref[...], preferred_element_type=jnp.float32)
    p = p_ref[0]                                                    # SMEM scalar
    safe = jnp.where(mel > 0.0, mel, 1.0)
    powed = jnp.where(mel > 0.0, jnp.exp(p * jnp.log(safe)), 0.0)
    o_ref[...] = powed * BN_SCALE                                   # BatchNorm2d(1)


def _conv_kernel(a_ref, w_ref, o_ref, *, relu):
    """im2col-matmul conv with folded BN and optional fused ReLU."""
    acc = jnp.dot(a_ref[...], w_ref[...], preferred_element_type=jnp.float32)
    if relu:
        acc = jnp.maximum(acc, 0.0)
    o_ref[...] = acc


def _conv_add_relu_kernel(a_ref, w_ref, res_ref, o_ref):
    """Second conv of a BasicBlock fused with identity residual add + ReLU."""
    acc = jnp.dot(a_ref[...], w_ref[...], preferred_element_type=jnp.float32)
    o_ref[...] = jnp.maximum(acc + res_ref[...], 0.0)


def _block_tail_kernel(a2_ref, w2_ref, ad_ref, wd_ref, o_ref):
    """conv2 + downsample conv + residual add + ReLU in one kernel."""
    y2 = jnp.dot(a2_ref[...], w2_ref[...], preferred_element_type=jnp.float32)
    idy = jnp.dot(ad_ref[...], wd_ref[...], preferred_element_type=jnp.float32)
    o_ref[...] = jnp.maximum(y2 + idy, 0.0)


def _max_reduce_kernel(x_ref, o_ref):
    # x: (K*K, rows, C) -> max over window positions
    o_ref[...] = jnp.max(x_ref[...], axis=0)


def _head_kernel(feat_ref, w_ref, b_ref, o_ref):
    # adaptive avg pool to 1x1 + 1x1 conv_out + bias (lane-padded to 128)
    f = jnp.mean(feat_ref[...], axis=1)                             # (B, 512)
    o_ref[...] = jnp.dot(f, w_ref[...], preferred_element_type=jnp.float32) + b_ref[...]


# ------------------------------ pallas_call glue ----------------------------
def _zero_map(ndim):
    return lambda i: (0,) * ndim


def _pcall(kernel, out_sds, *inputs):
    in_specs = [pl.BlockSpec(x.shape, _zero_map(x.ndim)) for x in inputs]
    out_specs = pl.BlockSpec(out_sds.shape, _zero_map(len(out_sds.shape)))
    return pl.pallas_call(
        kernel,
        out_shape=out_sds,
        grid=(1,),
        in_specs=in_specs,
        out_specs=out_specs,
        compiler_params=_CPARAMS,
    )(*inputs)


def mel_frontend(frames2d, params, p):
    out_sds = jax.ShapeDtypeStruct((frames2d.shape[0], N_MELS), jnp.float32)
    in_specs = [
        pl.BlockSpec(frames2d.shape, _zero_map(2)),
        pl.BlockSpec(params['mel_cos_w'].shape, _zero_map(2)),
        pl.BlockSpec(params['mel_sin_w'].shape, _zero_map(2)),
        pl.BlockSpec(params['mel_w'].shape, _zero_map(2)),
        pl.BlockSpec(memory_space=pltpu.MemorySpace.SMEM),   # pow exponent scalar
    ]
    out_specs = pl.BlockSpec(out_sds.shape, _zero_map(2))
    return pl.pallas_call(
        _mel_frontend_kernel,
        out_shape=out_sds,
        grid=(1,),
        in_specs=in_specs,
        out_specs=out_specs,
        compiler_params=_CPARAMS,
    )(frames2d, params['mel_cos_w'], params['mel_sin_w'], params['mel_w'], p)


# ------------------------------ NCHW <-> 2D glue ----------------------------
def to_nchw(y2d, b, oh, ow):
    c = y2d.shape[1]
    return y2d.reshape(b, oh, ow, c).transpose(0, 3, 1, 2)


def to_2d(x_nchw):
    b, c, h, w = x_nchw.shape
    return x_nchw.transpose(0, 2, 3, 1).reshape(b * h * w, c)


def _im2col(x_nchw, kh, kw, stride, pad, pad_value=0.0):
    b, c, h, w = x_nchw.shape
    if pad > 0:
        x_nchw = jnp.pad(x_nchw, ((0, 0), (0, 0), (pad, pad), (pad, pad)),
                         constant_values=pad_value)
    hp, wp = h + 2 * pad, w + 2 * pad
    oh = (hp - kh) // stride + 1
    ow = (wp - kw) // stride + 1
    cols = []
    for i in range(kh):
        for j in range(kw):
            cols.append(x_nchw[:, :,
                               i:i + stride * (oh - 1) + 1:stride,
                               j:j + stride * (ow - 1) + 1:stride])
    patches = jnp.stack(cols, axis=2)   # (B, C, KH*KW, OH, OW)
    return patches, oh, ow


def im2col_2d(x_nchw, kh, kw, stride, pad, dtype=jnp.bfloat16):
    """im2col -> (rows, ic*kh*kw) matrix (cast to bf16 for the MXU)."""
    b, ic = x_nchw.shape[0], x_nchw.shape[1]
    patches, oh, ow = _im2col(x_nchw, kh, kw, stride, pad)
    a = patches.transpose(0, 3, 4, 1, 2).reshape(b * oh * ow, ic * kh * kw)
    return a.astype(dtype), oh, ow


def conv_bn_act(x_nchw, w2d, kh, kw, stride, pad, relu):
    a, oh, ow = im2col_2d(x_nchw, kh, kw, stride, pad)
    kernel = functools.partial(_conv_kernel, relu=relu)
    y = _pcall(kernel,
               jax.ShapeDtypeStruct((a.shape[0], w2d.shape[1]), jnp.float32),
               a, w2d)
    return y, oh, ow


def maxpool2d(x_nchw, k, stride, pad):
    b, c = x_nchw.shape[0], x_nchw.shape[1]
    patches, oh, ow = _im2col(x_nchw, k, k, stride, pad, pad_value=-jnp.inf)
    p = patches.transpose(2, 0, 3, 4, 1).reshape(k * k, b * oh * ow, c)
    y2d = _pcall(_max_reduce_kernel,
                 jax.ShapeDtypeStruct((b * oh * ow, c), jnp.float32), p)
    return to_nchw(y2d, b, oh, ow)


# ------------------------- parameter construction ---------------------------
def get_fourier_weights_for_mel(window_size, hanning=True):
    frec = np.linspace(-window_size // 2, 0, window_size // 2 + 1)
    time = np.linspace(0, window_size - 1, window_size)
    hanning_window = np.hanning(window_size)
    filters_cos, filters_sin = [], []
    for f in frec:
        filters_cos.append(np.cos(2 * np.pi * f * time / window_size))
        filters_sin.append(np.sin(2 * np.pi * f * time / window_size))
    if hanning:
        filters_cos = np.array(filters_cos)[::-1] * hanning_window
        filters_sin = np.array(filters_sin)[::-1] * hanning_window
    else:
        filters_cos = np.array(filters_cos)[::-1]
        filters_sin = np.array(filters_sin)[::-1]
    return filters_cos.astype(np.float32), filters_sin.astype(np.float32)


def mel_filterbank(sr, n_fft, n_mels, fmin=0.0, fmax=None):
    # deterministic triangular mel filterbank (stand-in for librosa.filters.mel)
    if fmax is None:
        fmax = sr / 2.0
    hz2mel = lambda f: 2595.0 * np.log10(1.0 + f / 700.0)
    mel2hz = lambda m: 700.0 * (10.0 ** (m / 2595.0) - 1.0)
    n_bins = n_fft // 2 + 1
    fft_freqs = np.linspace(0.0, sr / 2.0, n_bins)
    mel_pts = np.linspace(hz2mel(fmin), hz2mel(fmax), n_mels + 2)
    hz_pts = mel2hz(mel_pts)
    fb = np.zeros((n_mels, n_bins), dtype=np.float64)
    for i in range(n_mels):
        l, c, r = hz_pts[i], hz_pts[i + 1], hz_pts[i + 2]
        up = (fft_freqs - l) / max(c - l, 1e-9)
        down = (r - fft_freqs) / max(r - c, 1e-9)
        fb[i] = np.maximum(0.0, np.minimum(up, down))
    enorm = 2.0 / (hz_pts[2:n_mels + 2] - hz_pts[:n_mels])
    fb *= enorm[:, None]
    return fb.astype(np.float32)


def _conv_w(key, oc, ic, kh, kw):
    fan_in = ic * kh * kw
    return jax.random.normal(key, (oc, ic, kh, kw), jnp.float32) / np.sqrt(fan_in)


def _fold_to_2d(w_oihw, bn_scale=BN_SCALE, dtype=jnp.bfloat16):
    """Fold eval-mode BN scale into the conv weight and pre-reshape for matmul."""
    oc, ic, kh, kw = w_oihw.shape
    w = w_oihw * bn_scale
    return w.reshape(oc, ic * kh * kw).T.astype(dtype)   # (ic*kh*kw, oc)


def init_birdsnet_params(key):
    params = {}
    keys = iter(jax.random.split(key, 64))

    # MelSpectrogramModel weights (transposed for RHS of the fused kernel)
    cos_w, sin_w = get_fourier_weights_for_mel(WINDOW)        # (n_bins, window)
    params['mel_cos_w'] = jnp.asarray(np.ascontiguousarray(cos_w.T))   # (window, n_bins)
    params['mel_sin_w'] = jnp.asarray(np.ascontiguousarray(sin_w.T))
    params['mel_w'] = jnp.asarray(mel_filterbank(SR, WINDOW, N_MELS).T)  # (n_bins, n_mels)

    # pow exponent parameter
    params['a'] = jnp.asarray([-1.2], jnp.float32)

    # ResNet-18 stem (resnet_BW: conv1 weights summed over RGB), BN folded
    w3 = _conv_w(next(keys), 64, 3, 7, 7)
    params['stem_w2d'] = _fold_to_2d(w3.sum(axis=1, keepdims=True))    # (49, 64)

    layer_cfg = [(64, 64, 1), (64, 128, 2), (128, 256, 2), (256, 512, 2)]
    blocks = []
    for cin, cout, stride in layer_cfg:
        for bi in range(2):
            b_in = cin if bi == 0 else cout
            b_stride = stride if bi == 0 else 1
            blk = {'stride': b_stride,
                   'w1_2d': _fold_to_2d(_conv_w(next(keys), cout, b_in, 3, 3)),
                   'w2_2d': _fold_to_2d(_conv_w(next(keys), cout, cout, 3, 3))}
            if b_stride != 1 or b_in != cout:
                blk['wd_2d'] = _fold_to_2d(_conv_w(next(keys), cout, b_in, 1, 1))
            blocks.append(blk)
    params['blocks'] = blocks

    # conv_out = Conv2d(512, n_classes, 1) with bias, padded to 128 lanes
    out_w = _conv_w(next(keys), N_CLASSES, 512, 1, 1)
    w_head = jnp.zeros((512, N_CLASSES_PAD), jnp.float32)
    w_head = w_head.at[:, :N_CLASSES].set(out_w.reshape(N_CLASSES, 512).T)
    params['head_w2d'] = w_head
    params['head_b'] = jnp.zeros((1, N_CLASSES_PAD), jnp.float32)
    return params


# ------------------------------- forward pass -------------------------------
def basic_block(x_nchw, blk):
    b = x_nchw.shape[0]
    stride = blk['stride']
    # conv1 + (folded) BN + ReLU
    y1, oh, ow = conv_bn_act(x_nchw, blk['w1_2d'], 3, 3, stride, 1, relu=True)
    # conv2 fused with residual (identity or downsample conv) + ReLU
    a2, oh2, ow2 = im2col_2d(to_nchw(y1, b, oh, ow), 3, 3, 1, 1)
    cout = blk['w2_2d'].shape[1]
    out_sds = jax.ShapeDtypeStruct((a2.shape[0], cout), jnp.float32)
    if 'wd_2d' in blk:
        ad, _, _ = im2col_2d(x_nchw, 1, 1, stride, 0)
        out = _pcall(_block_tail_kernel, out_sds, a2, blk['w2_2d'], ad, blk['wd_2d'])
    else:
        res2d = to_2d(x_nchw)
        out = _pcall(_conv_add_relu_kernel, out_sds, a2, blk['w2_2d'], res2d)
    return to_nchw(out, b, oh2, ow2)


def resnet18_forward(x_nchw, params):
    b = x_nchw.shape[0]
    y, oh, ow = conv_bn_act(x_nchw, params['stem_w2d'], 7, 7, 2, 3, relu=True)
    x = to_nchw(y, b, oh, ow)
    x = maxpool2d(x, 3, 2, 1)
    for blk in params['blocks']:
        x = basic_block(x, blk)
    bb, c, h, w = x.shape
    feat3d = x.transpose(0, 2, 3, 1).reshape(bb, h * w, c)
    return feat3d                                                  # (B, H*W, 512)


def birdsnet_forward(x, params):
    # x: (B, 1, T)   (PyTorch Conv1d layout)
    b, _, t = x.shape
    nframes = (t - WINDOW) // HOP + 1
    frames = jnp.stack([x[:, 0, f * HOP:f * HOP + WINDOW] for f in range(nframes)],
                       axis=1)                                     # (B, F, window)
    frames2d = frames.reshape(b * nframes, WINDOW)

    # fused: STFT power -> mel -> pow(sigmoid(a)) -> BatchNorm2d(1)
    p = jax.nn.sigmoid(params['a']).astype(jnp.float32)            # (1,) SMEM scalar
    mel2d = mel_frontend(frames2d, params, p)                      # (B*F, n_mels)

    # (B*F, n_mels) -> NCHW image (B, 1, n_mels, F)
    mel_img = mel2d.reshape(b, nframes, N_MELS).transpose(0, 2, 1)[:, None, :, :]

    feat3d = resnet18_forward(mel_img, params)                     # (B, HW, 512)

    # fused adaptive-avg-pool + 1x1 conv_out + bias (lane-padded), then slice
    logits_pad = _pcall(_head_kernel,
                        jax.ShapeDtypeStruct((b, N_CLASSES_PAD), jnp.float32),
                        feat3d, params['head_w2d'], params['head_b'])
    logits = logits_pad[:, :N_CLASSES]
    return mel_img, logits


# ----------------------------------- main ------------------------------------
if __name__ == "__main__":
    key = jax.random.PRNGKey(0)
    pkey, xkey = jax.random.split(key)
    params = init_birdsnet_params(pkey)

    x = jax.random.normal(xkey, (BATCH, 1, T_SAMPLES), jnp.float32)

    mel_norm, logits = birdsnet_forward(x, params)
    jax.block_until_ready((mel_norm, logits))

    assert mel_norm.shape == (BATCH, 1, N_MELS, N_FRAMES), mel_norm.shape
    assert logits.shape == (BATCH, N_CLASSES), logits.shape
    assert bool(jnp.all(jnp.isfinite(mel_norm))) and bool(jnp.all(jnp.isfinite(logits)))
    print("KERNEL_OK")
</pallas_src>

<mosaic_0001>
module attributes {stable_mosaic.version = 11 : i64} {
  func.func @_mel_frontend_kernel(%arg0: i32, %arg1: memref<26x256xf32, #tpu.memory_space<vmem>>, %arg2: memref<256x129xf32, #tpu.memory_space<vmem>>, %arg3: memref<256x129xf32, #tpu.memory_space<vmem>>, %arg4: memref<129x32xf32, #tpu.memory_space<vmem>>, %arg5: memref<1xf32, #tpu.memory_space<smem>>, %arg6: memref<26x32xf32, #tpu.memory_space<vmem>>) attributes {dimension_semantics = [#tpu.dimension_semantics<arbitrary>], iteration_bounds = array<i64: 1>, scalar_prefetch = 0 : i64, scratch_operands = 0 : i64, tpu.core_type = #tpu.core_type<tc>, window_params = [{pipeline_mode = #tpu.pipeline_mode<synchronous>, transform_indices = @transform_0, window_bounds = array<i64: 26, 256>}, {pipeline_mode = #tpu.pipeline_mode<synchronous>, transform_indices = @transform_1, window_bounds = array<i64: 256, 129>}, {pipeline_mode = #tpu.pipeline_mode<synchronous>, transform_indices = @transform_2, window_bounds = array<i64: 256, 129>}, {pipeline_mode = #tpu.pipeline_mode<synchronous>, transform_indices = @transform_3, window_bounds = array<i64: 129, 32>}, {transform_indices = @transform_4, window_bounds = array<i64: 1>}, {pipeline_mode = #tpu.pipeline_mode<synchronous>, transform_indices = @transform_5, window_bounds = array<i64: 26, 32>}]} {
    %c0 = arith.constant 0 : index
    %c0_0 = arith.constant 0 : index
    %0 = vector.load %arg1[%c0, %c0_0] : memref<26x256xf32, #tpu.memory_space<vmem>>, vector<26x256xf32>
    %c0_1 = arith.constant 0 : index
    %c0_2 = arith.constant 0 : index
    %1 = vector.load %arg2[%c0_1, %c0_2] : memref<256x129xf32, #tpu.memory_space<vmem>>, vector<256x129xf32>
    %cst = arith.constant dense<0.000000e+00> : vector<26x129xf32>
    %2 = tpu.matmul %0, %1, %cst {dimension_numbers = #tpu.dot_dimension_numbers<[1], [0], [0], [1], [0, 0, 1, 1], [], []>} : vector<26x256xf32>, vector<256x129xf32>, vector<26x129xf32> -> vector<26x129xf32>
    %c0_3 = arith.constant 0 : index
    %c0_4 = arith.constant 0 : index
    %3 = vector.load %arg3[%c0_3, %c0_4] : memref<256x129xf32, #tpu.memory_space<vmem>>, vector<256x129xf32>
    %cst_5 = arith.constant dense<0.000000e+00> : vector<26x129xf32>
    %4 = tpu.matmul %0, %3, %cst_5 {dimension_numbers = #tpu.dot_dimension_numbers<[1], [0], [0], [1], [0, 0, 1, 1], [], []>} : vector<26x256xf32>, vector<256x129xf32>, vector<26x129xf32> -> vector<26x129xf32>
    %5 = arith.mulf %2, %2 : vector<26x129xf32>
    %6 = arith.mulf %4, %4 : vector<26x129xf32>
    %7 = arith.addf %5, %6 : vector<26x129xf32>
    %c0_6 = arith.constant 0 : index
    %c0_7 = arith.constant 0 : index
    %8 = vector.load %arg4[%c0_6, %c0_7] : memref<129x32xf32, #tpu.memory_space<vmem>>, vector<129x32xf32>
    %cst_8 = arith.constant dense<0.000000e+00> : vector<26x32xf32>
    %9 = tpu.matmul %7, %8, %cst_8 {dimension_numbers = #tpu.dot_dimension_numbers<[1], [0], [0], [1], [0, 0, 1, 1], [], []>} : vector<26x129xf32>, vector<129x32xf32>, vector<26x32xf32> -> vector<26x32xf32>
    %c0_9 = arith.constant 0 : index
    %10 = memref.load %arg5[%c0_9] : memref<1xf32, #tpu.memory_space<smem>>
    %cst_10 = arith.constant 0.000000e+00 : f32
    %11 = vector.broadcast %cst_10 : f32 to vector<26x32xf32>
    %12 = arith.cmpf ogt, %9, %11 : vector<26x32xf32>
    %cst_11 = arith.constant 1.000000e+00 : f32
    %13 = vector.broadcast %cst_11 : f32 to vector<26x32xf32>
    %14 = arith.select %12, %9, %13 : vector<26x32xi1>, vector<26x32xf32>
    %cst_12 = arith.constant 0.000000e+00 : f32
    %15 = vector.broadcast %cst_12 : f32 to vector<26x32xf32>
    %16 = arith.cmpf ogt, %9, %15 : vector<26x32xf32>
    %17 = math.log %14 : vector<26x32xf32>
    %18 = vector.broadcast %10 : f32 to vector<26x32xf32>
    %19 = arith.mulf %18, %17 : vector<26x32xf32>
    %20 = math.exp %19 : vector<26x32xf32>
    %cst_13 = arith.constant 0.000000e+00 : f32
    %21 = vector.broadcast %cst_13 : f32 to vector<26x32xf32>
    %22 = arith.select %16, %20, %21 : vector<26x32xi1>, vector<26x32xf32>
    %cst_14 = arith.constant 0.999994993 : f32
    %23 = vector.broadcast %cst_14 : f32 to vector<26x32xf32>
    %24 = arith.mulf %22, %23 : vector<26x32xf32>
    %c0_15 = arith.constant 0 : index
    %c0_16 = arith.constant 0 : index
    %25 = vector.load %arg6[%c0_15, %c0_16] : memref<26x32xf32, #tpu.memory_space<vmem>>, vector<26x32xf32>
    tpu.vector_store %arg6[%c0_15, %c0_16], %24 {strides = array<i32>} : memref<26x32xf32, #tpu.memory_space<vmem>>, vector<26x32xf32>,
    return
  }
  func.func @transform_0(%arg0: i32) -> (i32, i32) {
    %c0_i32 = arith.constant 0 : i32
    %c0_i32_0 = arith.constant 0 : i32
    %c0_i32_1 = arith.constant 0 : i32
    return %c0_i32, %c0_i32_0 : i32, i32
  }
  func.func @transform_1(%arg0: i32) -> (i32, i32) {
    %c0_i32 = arith.constant 0 : i32
    %c0_i32_0 = arith.constant 0 : i32
    %c0_i32_1 = arith.constant 0 : i32
    return %c0_i32, %c0_i32_0 : i32, i32
  }
  func.func @transform_2(%arg0: i32) -> (i32, i32) {
    %c0_i32 = arith.constant 0 : i32
    %c0_i32_0 = arith.constant 0 : i32
    %c0_i32_1 = arith.constant 0 : i32
    return %c0_i32, %c0_i32_0 : i32, i32
  }
  func.func @transform_3(%arg0: i32) -> (i32, i32) {
    %c0_i32 = arith.constant 0 : i32
    %c0_i32_0 = arith.constant 0 : i32
    %c0_i32_1 = arith.constant 0 : i32
    return %c0_i32, %c0_i32_0 : i32, i32
  }
  func.func @transform_4(%arg0: i32) -> i32 {
    %c0_i32 = arith.constant 0 : i32
    %c0_i32_0 = arith.constant 0 : i32
    return %c0_i32 : i32
  }
  func.func @transform_5(%arg0: i32) -> (i32, i32) {
    %c0_i32 = arith.constant 0 : i32
    %c0_i32_0 = arith.constant 0 : i32
    %c0_i32_1 = arith.constant 0 : i32
    return %c0_i32, %c0_i32_0 : i32, i32
  }
}

</mosaic_0001>

<llo_original>
// kernel: tpu_custom_call.1
$region0: #{tpu_custom_call.1}
  #allocation0 [shape = 'u32[]', space=smem, size = 0x4, offset = 0x4, fixed_abs, tag = 'smem constant byte address 0x4 - core index']
  #allocation1 [shape = 'u32[144,128]{1,0:T(1,128)}', space=vmem, size = 0x12000, scoped, tag = 'internal scratch']
  #allocation2 [shape = 'f32[1]{0:T(128)S(6)}', space=smem, size = 0x200, scoped, tag = 'scoped memory for tpu_custom_call.1']
  %s0 = inlined_call_operand.vmem [shape: f32[26,256], index: 0, kind: input, shape index: {}]
  %s1 = inlined_call_operand.vmem [shape: f32[256,129], index: 1, kind: input, shape index: {}]
  %s2 = inlined_call_operand.vmem [shape: f32[256,129], index: 2, kind: input, shape index: {}]
  %s3 = inlined_call_operand.vmem [shape: f32[129,32], index: 3, kind: input, shape index: {}]
  %s4 = inlined_call_operand.<no memory space> [shape: f32[1], index: 4, kind: input, shape index: {}]
  %s5 = inlined_call_operand.hbm [shape: f32[26,32], index: 5, kind: output, shape index: {}]
  %s6 = sld [smem:[#allocation0]]
  $region30: #{tpu_custom_call.1} parent=0
    _
  %s8 = ssub.s32 1, %s6
  %s9 = scalar_select 0, %s8, %s6
  %10 = sst [smem:[#allocation2]] %s4
  $region1: #{tpu_custom_call.1} parent=0
    #allocation3 [shape = 'u8[16384]{0}', space=vmem, size = 0x4000, scoped, tag = 'output window, operand 0, single buffered']
    #allocation4 [shape = 's32[1]{0}', space=sflag, size = 0x4, scoped, tag = 'scoped memory for tpu_custom_call.1']
    %11 = vsyncpa [#allocation4], 0
    // Predicated region
    $region2: #{tpu_custom_call.1} parent=1 // pred_check
      _
    $region3: #{tpu_custom_call.1} parent=1 // pred_check_branch
      %13 = sbr.rel (0) target = $region5
    $region4: #{tpu_custom_call.1} parent=1 // pred_region
      _
    $region5: #{tpu_custom_call.1} parent=1 // pred_fallthru
      _
    // Predicated region
    $region6: #{tpu_custom_call.1} parent=1 // pred_check
      _
    $region7: #{tpu_custom_call.1} parent=1 // pred_check_branch
      %15 = sbr.rel (0) target = $region9
    $region8: #{tpu_custom_call.1} parent=1 // pred_region
      _
    $region9: #{tpu_custom_call.1} parent=1 // pred_fallthru
      _
    // Predicated region
    $region10: #{tpu_custom_call.1} parent=1 // pred_check
      _
    $region11: #{tpu_custom_call.1} parent=1 // pred_check_branch
      %17 = sbr.rel (0) target = $region13
    $region12: #{tpu_custom_call.1} parent=1 // pred_region
      _
    $region13: #{tpu_custom_call.1} parent=1 // pred_fallthru
      _
    // Predicated region
    $region14: #{tpu_custom_call.1} parent=1 // pred_check
      _
    $region15: #{tpu_custom_call.1} parent=1 // pred_check_branch
      %19 = sbr.rel (0) target = $region17
    $region16: #{tpu_custom_call.1} parent=1 // pred_region
      _
    $region17: #{tpu_custom_call.1} parent=1 // pred_fallthru
      _
    // Predicated region
    $region18: #{tpu_custom_call.1} parent=1 // pred_check
      _
    $region19: #{tpu_custom_call.1} parent=1 // pred_check_branch
      %21 = sbr.rel (0) target = $region21
    $region20: #{tpu_custom_call.1} parent=1 // pred_region
      _
    $region21: #{tpu_custom_call.1} parent=1 // pred_fallthru
      _
    %v22 = vld [vmem:[%s0] sm:$0xff]
    %v23 = vld [vmem:[%s0 + $0x8] sm:$0xff]
    %v24 = vld [vmem:[%s0 + $0x10] sm:$0xff]
    %v25 = vld [vmem:[%s0 + $0x18] sm:$0xff]
    %v26 = vld [vmem:[%s0 + $0x20] sm:$0xff]
    %v27 = vld [vmem:[%s0 + $0x28] sm:$0xff]
    %v28 = vld [vmem:[%s0 + $0x30] sm:$0x3]
    %v29 = vld [vmem:[%s0 + $0x38] sm:$0x3]
    %v30 = vld [vmem:[%s1] sm:$0xff]
    %v31 = vld [vmem:[%s1 + $0x8] sm:$0xff]
    %v32 = vld [vmem:[%s1 + $0x10] sm:$0xff]
    %v33 = vld [vmem:[%s1 + $0x18] sm:$0xff]
    %v34 = vld [vmem:[%s1 + $0x20] sm:$0xff]
    %v35 = vld [vmem:[%s1 + $0x28] sm:$0xff]
    %v36 = vld [vmem:[%s1 + $0x30] sm:$0xff]
    %v37 = vld [vmem:[%s1 + $0x38] sm:$0xff]
    %v38 = vld [vmem:[%s1 + $0x40] sm:$0xff]
    %v39 = vld [vmem:[%s1 + $0x48] sm:$0xff]
    %v40 = vld [vmem:[%s1 + $0x50] sm:$0xff]
    %v41 = vld [vmem:[%s1 + $0x58] sm:$0xff]
    %v42 = vld [vmem:[%s1 + $0x60] sm:$0xff]
    %v43 = vld [vmem:[%s1 + $0x68] sm:$0xff]
    %v44 = vld [vmem:[%s1 + $0x70] sm:$0xff]
    %v45 = vld [vmem:[%s1 + $0x78] sm:$0xff]
    %v46 = vld [vmem:[%s1 + $0x80] sm:$0xff]
    %v47 = vld [vmem:[%s1 + $0x88] sm:$0xff]
    %v48 = vld [vmem:[%s1 + $0x90] sm:$0xff]
    %v49 = vld [vmem:[%s1 + $0x98] sm:$0xff]
    %v50 = vld [vmem:[%s1 + $0xa0] sm:$0xff]
    %v51 = vld [vmem:[%s1 + $0xa8] sm:$0xff]
    %v52 = vld [vmem:[%s1 + $0xb0] sm:$0xff]
    %v53 = vld [vmem:[%s1 + $0xb8] sm:$0xff]
    %v54 = vld [vmem:[%s1 + $0xc0] sm:$0xff]
    %v55 = vld [vmem:[%s1 + $0xc8] sm:$0xff]
    %v56 = vld [vmem:[%s1 + $0xd0] sm:$0xff]
    %v57 = vld [vmem:[%s1 + $0xd8] sm:$0xff]
    %v58 = vld [vmem:[%s1 + $0xe0] sm:$0xff]
    %v59 = vld [vmem:[%s1 + $0xe8] sm:$0xff]
    %v60 = vld [vmem:[%s1 + $0xf0] sm:$0xff]
    %v61 = vld [vmem:[%s1 + $0xf8] sm:$0xff]
    %v62 = vld [vmem:[%s1 + $0x100] sm:$0xff]
    %v63 = vld [vmem:[%s1 + $0x108] sm:$0xff]
    %v64 = vld [vmem:[%s1 + $0x110] sm:$0xff]
    %v65 = vld [vmem:[%s1 + $0x118] sm:$0xff]
    %v66 = vld [vmem:[%s1 + $0x120] sm:$0xff]
    %v67 = vld [vmem:[%s1 + $0x128] sm:$0xff]
    %v68 = vld [vmem:[%s1 + $0x130] sm:$0xff]
    %v69 = vld [vmem:[%s1 + $0x138] sm:$0xff]
    %v70 = vld [vmem:[%s1 + $0x140] sm:$0xff]
    %v71 = vld [vmem:[%s1 + $0x148] sm:$0xff]
    %v72 = vld [vmem:[%s1 + $0x150] sm:$0xff]
    %v73 = vld [vmem:[%s1 + $0x158] sm:$0xff]
    %v74 = vld [vmem:[%s1 + $0x160] sm:$0xff]
    %v75 = vld [vmem:[%s1 + $0x168] sm:$0xff]
    %v76 = vld [vmem:[%s1 + $0x170] sm:$0xff]
    %v77 = vld [vmem:[%s1 + $0x178] sm:$0xff]
    %v78 = vld [vmem:[%s1 + $0x180] sm:$0xff]
    %v79 = vld [vmem:[%s1 + $0x188] sm:$0xff]
    %v80 = vld [vmem:[%s1 + $0x190] sm:$0xff]
    %v81 = vld [vmem:[%s1 + $0x198] sm:$0xff]
    %v82 = vld [vmem:[%s1 + $0x1a0] sm:$0xff]
    %v83 = vld [vmem:[%s1 + $0x1a8] sm:$0xff]
    %v84 = vld [vmem:[%s1 + $0x1b0] sm:$0xff]
    %v85 = vld [vmem:[%s1 + $0x1b8] sm:$0xff]
    %v86 = vld [vmem:[%s1 + $0x1c0] sm:$0xff]
    %v87 = vld [vmem:[%s1 + $0x1c8] sm:$0xff]
    %v88 = vld [vmem:[%s1 + $0x1d0] sm:$0xff]
    %v89 = vld [vmem:[%s1 + $0x1d8] sm:$0xff]
    %v90 = vld [vmem:[%s1 + $0x1e0] sm:$0xff]
    %v91 = vld [vmem:[%s1 + $0x1e8] sm:$0xff]
    %v92 = vld [vmem:[%s1 + $0x1f0] sm:$0xff]
    %v93 = vld [vmem:[%s1 + $0x1f8] sm:$0xff]
    %94 = vmatprep.subr.mxu0 %v31
    %95 = vmatpush1.msra.mxu0 %v30
    %96 = vmatprep.subr.mxu0 %v33
    %97 = vmatpush1.msra.mxu0 %v32
    %98 = vmatprep.subr.mxu0 %v35
    %99 = vmatpush1.msra.mxu0 %v34
    %100 = vmatprep.subr.mxu0 %v37
    %101 = vmatpush1.msra.mxu0 %v36
    %102 = vmatprep.subr.mxu0 %v39
    %103 = vmatpush1.msra.mxu0 %v38
    %104 = vmatprep.subr.mxu0 %v41
    %105 = vmatpush1.msra.mxu0 %v40
    %106 = vmatprep.subr.mxu0 %v43
    %107 = vmatpush1.msra.mxu0 %v42
    %108 = vmatprep.subr.mxu0 %v45
    %109 = vmatpush1.msra.mxu0 %v44
    %110 = vmatprep.subr.mxu0 %v47
    %111 = vmatpush1.msra.mxu0 %v46
    %112 = vmatprep.subr.mxu0 %v49
    %113 = vmatpush1.msra.mxu0 %v48
    %114 = vmatprep.subr.mxu0 %v51
    %115 = vmatpush1.msra.mxu0 %v50
    %116 = vmatprep.subr.mxu0 %v53
    %117 = vmatpush1.msra.mxu0 %v52
    %118 = vmatprep.subr.mxu0 %v55
    %119 = vmatpush1.msra.mxu0 %v54
    %120 = vmatprep.subr.mxu0 %v57
    %121 = vmatpush1.msra.mxu0 %v56
    %122 = vmatprep.subr.mxu0 %v59
    %123 = vmatpush1.msra.mxu0 %v58
    %124 = vmatprep.subr.mxu0 %v61
    %125 = vmatpush1.msra.mxu0 %v60
    %126 = vmatprep.subr.mxu0 %v63
    %127 = vmatpush1.msra.mxu0 %v62
    %128 = vmatprep.subr.mxu0 %v65
    %129 = vmatpush1.msra.mxu0 %v64
    %130 = vmatprep.subr.mxu0 %v67
    %131 = vmatpush1.msra.mxu0 %v66
    %132 = vmatprep.subr.mxu0 %v69
    %133 = vmatpush1.msra.mxu0 %v68
    %134 = vmatprep.subr.mxu0 %v71
    %135 = vmatpush1.msra.mxu0 %v70
    %136 = vmatprep.subr.mxu0 %v73
    %137 = vmatpush1.msra.mxu0 %v72
    %138 = vmatprep.subr.mxu0 %v75
    %139 = vmatpush1.msra.mxu0 %v74
    %140 = vmatprep.subr.mxu0 %v77
    %141 = vmatpush1.msra.mxu0 %v76
    %142 = vmatprep.subr.mxu0 %v79
    %143 = vmatpush1.msra.mxu0 %v78
    %144 = vmatprep.subr.mxu0 %v81
    %145 = vmatpush1.msra.mxu0 %v80
    %146 = vmatprep.subr.mxu0 %v83
    %147 = vmatpush1.msra.mxu0 %v82
    %148 = vmatprep.subr.mxu0 %v85
    %149 = vmatpush1.msra.mxu0 %v84
    %150 = vmatprep.subr.mxu0 %v87
    %151 = vmatpush1.msra.mxu0 %v86
    %152 = vmatprep.subr.mxu0 %v89
    %153 = vmatpush1.msra.mxu0 %v88
    %154 = vmatprep.subr.mxu0 %v91
    %155 = vmatpush1.msra.mxu0 %v90
    %156 = vmatprep.subr.mxu0 %v93
    %157 = vmatpush1.msra.mxu0 %v92
    %158 = vmatprep.mubr.f32.mxu0 %v23
    %159 = vmatmul.mubr.f32.gmra.mrb[0].mxu0 %v22
    %v160 = vpop.f32.mrb[0].mxu0
    %v161 = vadd.f32 0.0, %v160
    %v162 = vpop.f32.mrb[0].mxu0
    %v163 = vadd.f32 0.0, %v162
    %164 = vmatprep.mubr.f32.mxu0 %v25
    %165 = vmatmul.mubr.f32.gmra.mrb[0].mxu0 %v24
    %v166 = vpop.f32.mrb[0].mxu0
    %v167 = vadd.f32 0.0, %v166
    %v168 = vpop.f32.mrb[0].mxu0
    %v169 = vadd.f32 0.0, %v168
    %170 = vmatprep.mubr.f32.mxu0 %v27
    %171 = vmatmul.mubr.f32.gmra.mrb[0].mxu0 %v26
    %v172 = vpop.f32.mrb[0].mxu0
    %v173 = vadd.f32 0.0, %v172
    %v174 = vpop.f32.mrb[0].mxu0
    %v175 = vadd.f32 0.0, %v174
    %176 = vmatprep.mubr.f32.mxu0 %v29
    %177 = vmatmul.mubr.f32.gmra.mrb[0].mxu0 %v28
    %v178 = vpop.f32.mrb[0].mxu0
    %v179 = vadd.f32 0.0, %v178
    %v180 = vpop.f32.mrb[0].mxu0
    %v181 = vadd.f32 0.0, %v180
    %182 = vdwg.mxu0
    %v183 = vld [vmem:[%s2] sm:$0xff]
    %v184 = vld [vmem:[%s2 + $0x8] sm:$0xff]
    %v185 = vld [vmem:[%s2 + $0x10] sm:$0xff]
    %v186 = vld [vmem:[%s2 + $0x18] sm:$0xff]
    %v187 = vld [vmem:[%s2 + $0x20] sm:$0xff]
    %v188 = vld [vmem:[%s2 + $0x28] sm:$0xff]
    %v189 = vld [vmem:[%s2 + $0x30] sm:$0xff]
    %v190 = vld [vmem:[%s2 + $0x38] sm:$0xff]
    %v191 = vld [vmem:[%s2 + $0x40] sm:$0xff]
    %v192 = vld [vmem:[%s2 + $0x48] sm:$0xff]
    %v193 = vld [vmem:[%s2 + $0x50] sm:$0xff]
    %v194 = vld [vmem:[%s2 + $0x58] sm:$0xff]
    %v195 = vld [vmem:[%s2 + $0x60] sm:$0xff]
    %v196 = vld [vmem:[%s2 + $0x68] sm:$0xff]
    %v197 = vld [vmem:[%s2 + $0x70] sm:$0xff]
    %v198 = vld [vmem:[%s2 + $0x78] sm:$0xff]
    %v199 = vld [vmem:[%s2 + $0x80] sm:$0xff]
    %v200 = vld [vmem:[%s2 + $0x88] sm:$0xff]
    %v201 = vld [vmem:[%s2 + $0x90] sm:$0xff]
    %v202 = vld [vmem:[%s2 + $0x98] sm:$0xff]
    %v203 = vld [vmem:[%s2 + $0xa0] sm:$0xff]
    %v204 = vld [vmem:[%s2 + $0xa8] sm:$0xff]
    %v205 = vld [vmem:[%s2 + $0xb0] sm:$0xff]
    %v206 = vld [vmem:[%s2 + $0xb8] sm:$0xff]
    %v207 = vld [vmem:[%s2 + $0xc0] sm:$0xff]
    %v208 = vld [vmem:[%s2 + $0xc8] sm:$0xff]
    %v209 = vld [vmem:[%s2 + $0xd0] sm:$0xff]
    %v210 = vld [vmem:[%s2 + $0xd8] sm:$0xff]
    %v211 = vld [vmem:[%s2 + $0xe0] sm:$0xff]
    %v212 = vld [vmem:[%s2 + $0xe8] sm:$0xff]
    %v213 = vld [vmem:[%s2 + $0xf0] sm:$0xff]
    %v214 = vld [vmem:[%s2 + $0xf8] sm:$0xff]
    %v215 = vld [vmem:[%s2 + $0x100] sm:$0xff]
    %v216 = vld [vmem:[%s2 + $0x108] sm:$0xff]
    %v217 = vld [vmem:[%s2 + $0x110] sm:$0xff]
    %v218 = vld [vmem:[%s2 + $0x118] sm:$0xff]
    %v219 = vld [vmem:[%s2 + $0x120] sm:$0xff]
    %v220 = vld [vmem:[%s2 + $0x128] sm:$0xff]
    %v221 = vld [vmem:[%s2 + $0x130] sm:$0xff]
    %v222 = vld [vmem:[%s2 + $0x138] sm:$0xff]
    %v223 = vld [vmem:[%s2 + $0x140] sm:$0xff]
    %v224 = vld [vmem:[%s2 + $0x148] sm:$0xff]
    %v225 = vld [vmem:[%s2 + $0x150] sm:$0xff]
    %v226 = vld [vmem:[%s2 + $0x158] sm:$0xff]
    %v227 = vld [vmem:[%s2 + $0x160] sm:$0xff]
    %v228 = vld [vmem:[%s2 + $0x168] sm:$0xff]
    %v229 = vld [vmem:[%s2 + $0x170] sm:$0xff]
    %v230 = vld [vmem:[%s2 + $0x178] sm:$0xff]
    %v231 = vld [vmem:[%s2 + $0x180] sm:$0xff]
    %v232 = vld [vmem:[%s2 + $0x188] sm:$0xff]
    %v233 = vld [vmem:[%s2 + $0x190] sm:$0xff]
    %v234 = vld [vmem:[%s2 + $0x198] sm:$0xff]
    %v235 = vld [vmem:[%s2 + $0x1a0] sm:$0xff]
    %v236 = vld [vmem:[%s2 + $0x1a8] sm:$0xff]
    %v237 = vld [vmem:[%s2 + $0x1b0] sm:$0xff]
    %v238 = vld [vmem:[%s2 + $0x1b8] sm:$0xff]
    %v239 = vld [vmem:[%s2 + $0x1c0] sm:$0xff]
    %v240 = vld [vmem:[%s2 + $0x1c8] sm:$0xff]
    %v241 = vld [vmem:[%s2 + $0x1d0] sm:$0xff]
    %v242 = vld [vmem:[%s2 + $0x1d8] sm:$0xff]
    %v243 = vld [vmem:[%s2 + $0x1e0] sm:$0xff]
    %v244 = vld [vmem:[%s2 + $0x1e8] sm:$0xff]
    %v245 = vld [vmem:[%s2 + $0x1f0] sm:$0xff]
    %v246 = vld [vmem:[%s2 + $0x1f8] sm:$0xff]
    %247 = vmatprep.subr.mxu0 %v184
    %248 = vmatpush1.msra.mxu0 %v183
    %249 = vmatprep.subr.mxu0 %v186
    %250 = vmatpush1.msra.mxu0 %v185
    %251 = vmatprep.subr.mxu0 %v188
    %252 = vmatpush1.msra.mxu0 %v187
    %253 = vmatprep.subr.mxu0 %v190
    %254 = vmatpush1.msra.mxu0 %v189
    %255 = vmatprep.subr.mxu0 %v192
    %256 = vmatpush1.msra.mxu0 %v191
    %257 = vmatprep.subr.mxu0 %v194
    %258 = vmatpush1.msra.mxu0 %v193
    %259 = vmatprep.subr.mxu0 %v196
    %260 = vmatpush1.msra.mxu0 %v195
    %261 = vmatprep.subr.mxu0 %v198
    %262 = vmatpush1.msra.mxu0 %v197
    %263 = vmatprep.subr.mxu0 %v200
    %264 = vmatpush1.msra.mxu0 %v199
    %265 = vmatprep.subr.mxu0 %v202
    %266 = vmatpush1.msra.mxu0 %v201
    %267 = vmatprep.subr.mxu0 %v204
    %268 = vmatpush1.msra.mxu0 %v203
    %269 = vmatprep.subr.mxu0 %v206
    %270 = vmatpush1.msra.mxu0 %v205
    %271 = vmatprep.subr.mxu0 %v208
    %272 = vmatpush1.msra.mxu0 %v207
    %273 = vmatprep.subr.mxu0 %v210
    %274 = vmatpush1.msra.mxu0 %v209
    %275 = vmatprep.subr.mxu0 %v212
    %276 = vmatpush1.msra.mxu0 %v211
    %277 = vmatprep.subr.mxu0 %v214
    %278 = vmatpush1.msra.mxu0 %v213
    %279 = vmatprep.subr.mxu0 %v216
    %280 = vmatpush1.msra.mxu0 %v215
    %281 = vmatprep.subr.mxu0 %v218
    %282 = vmatpush1.msra.mxu0 %v217
    %283 = vmatprep.subr.mxu0 %v220
    %284 = vmatpush1.msra.mxu0 %v219
    %285 = vmatprep.subr.mxu0 %v222
    %286 = vmatpush1.msra.mxu0 %v221
    %287 = vmatprep.subr.mxu0 %v224
    %288 = vmatpush1.msra.mxu0 %v223
    %289 = vmatprep.subr.mxu0 %v226
    %290 = vmatpush1.msra.mxu0 %v225
    %291 = vmatprep.subr.mxu0 %v228
    %292 = vmatpush1.msra.mxu0 %v227
    %293 = vmatprep.subr.mxu0 %v230
    %294 = vmatpush1.msra.mxu0 %v229
    %295 = vmatprep.subr.mxu0 %v232
    %296 = vmatpush1.msra.mxu0 %v231
    %297 = vmatprep.subr.mxu0 %v234
    %298 = vmatpush1.msra.mxu0 %v233
    %299 = vmatprep.subr.mxu0 %v236
    %300 = vmatpush1.msra.mxu0 %v235
    %301 = vmatprep.subr.mxu0 %v238
    %302 = vmatpush1.msra.mxu0 %v237
    %303 = vmatprep.subr.mxu0 %v240
    %304 = vmatpush1.msra.mxu0 %v239
    %305 = vmatprep.subr.mxu0 %v242
    %306 = vmatpush1.msra.mxu0 %v241
    %307 = vmatprep.subr.mxu0 %v244
    %308 = vmatpush1.msra.mxu0 %v243
    %309 = vmatprep.subr.mxu0 %v246
    %310 = vmatpush1.msra.mxu0 %v245
    %311 = vmatprep.mubr.f32.mxu0 %v23
    %312 = vmatmul.mubr.f32.gmra.mrb[0].mxu0 %v22
    %v313 = vpop.f32.mrb[0].mxu0
    %v314 = vadd.f32 0.0, %v313
    %v315 = vpop.f32.mrb[0].mxu0
    %v316 = vadd.f32 0.0, %v315
    %317 = vmatprep.mubr.f32.mxu0 %v25
    %318 = vmatmul.mubr.f32.gmra.mrb[0].mxu0 %v24
    %v319 = vpop.f32.mrb[0].mxu0
    %v320 = vadd.f32 0.0, %v319
    %v321 = vpop.f32.mrb[0].mxu0
    %v322 = vadd.f32 0.0, %v321
    %323 = vmatprep.mubr.f32.mxu0 %v27
    %324 = vmatmul.mubr.f32.gmra.mrb[0].mxu0 %v26
    %v325 = vpop.f32.mrb[0].mxu0
    %v326 = vadd.f32 0.0, %v325
    %v327 = vpop.f32.mrb[0].mxu0
    %v328 = vadd.f32 0.0, %v327
    %329 = vmatprep.mubr.f32.mxu0 %v29
    %330 = vmatmul.mubr.f32.gmra.mrb[0].mxu0 %v28
    %v331 = vpop.f32.mrb[0].mxu0
    %v332 = vadd.f32 0.0, %v331
    %v333 = vpop.f32.mrb[0].mxu0
    %v334 = vadd.f32 0.0, %v333
    %335 = vdwg.mxu0
    %v336 = vmul.f32 %v161, %v161
    %v337 = vmul.f32 %v163, %v163
    %v338 = vmul.f32 %v167, %v167
    %v339 = vmul.f32 %v169, %v169
    %v340 = vmul.f32 %v173, %v173
    %v341 = vmul.f32 %v175, %v175
    %v342 = vmul.f32 %v179, %v179
    %v343 = vmul.f32 %v181, %v181
    %v344 = vmul.f32 %v314, %v314
    %v345 = vmul.f32 %v316, %v316
    %v346 = vmul.f32 %v320, %v320
    %v347 = vmul.f32 %v322, %v322
    %v348 = vmul.f32 %v326, %v326
    %v349 = vmul.f32 %v328, %v328
    %v350 = vmul.f32 %v332, %v332
    %v351 = vmul.f32 %v334, %v334
    %v352 = vadd.f32 %v336, %v344
    %v353 = vadd.f32 %v337, %v345
    %v354 = vadd.f32 %v338, %v346
    %v355 = vadd.f32 %v339, %v347
    %v356 = vadd.f32 %v340, %v348
    %v357 = vadd.f32 %v341, %v349
    %v358 = vadd.f32 %v342, %v350
    %v359 = vadd.f32 %v343, %v351
    %v360 = vld [vmem:[%s3] sm:$0xff]
    %v361 = vld [vmem:[%s3 + $0x8] sm:$0xff]
    %v362 = vld [vmem:[%s3 + $0x10] sm:$0xff]
    %v363 = vld [vmem:[%s3 + $0x18] sm:$0xff]
    %v364 = vld [vmem:[%s3 + $0x20] sm:$0xff]
    %v365 = vld [vmem:[%s3 + $0x28] sm:$0xff]
    %v366 = vld [vmem:[%s3 + $0x30] sm:$0xff]
    %v367 = vld [vmem:[%s3 + $0x38] sm:$0xff]
    %v368 = vld [vmem:[%s3 + $0x40] sm:$0xff]
    %v369 = vld [vmem:[%s3 + $0x48] sm:$0xff]
    %v370 = vld [vmem:[%s3 + $0x50] sm:$0xff]
    %v371 = vld [vmem:[%s3 + $0x58] sm:$0xff]
    %v372 = vld [vmem:[%s3 + $0x60] sm:$0xff]
    %v373 = vld [vmem:[%s3 + $0x68] sm:$0xff]
    %v374 = vld [vmem:[%s3 + $0x70] sm:$0xff]
    %v375 = vld [vmem:[%s3 + $0x78] sm:$0xff]
    %v376 = vld [vmem:[%s3 + $0x80] sm:$0x1]
    %vm377 = vcmask 7168
    %v379 = vsel %vm377, %v353, 0
    %v382 = vsel %vm377, %v355, 0
    %v385 = vsel %vm377, %v357, 0
    %v388 = vsel %vm377, %v359, 0
    %vm390 = vcmask 1040384
    %v392 = vsel %vm390, %v376, 0
    %394 = vmatprep.subr.mxu0 0.0
    %395 = vmatpush1.msra.mxu0 %v360
    %396 = vmatprep.subr.mxu0 0.0
    %397 = vmatpush1.msra.mxu0 %v361
    %398 = vmatprep.subr.mxu0 0.0
    %399 = vmatpush1.msra.mxu0 %v362
    %400 = vmatprep.subr.mxu0 0.0
    %401 = vmatpush1.msra.mxu0 %v363
    %402 = vmatprep.subr.mxu0 0.0
    %403 = vmatpush1.msra.mxu0 %v364
    %404 = vmatprep.subr.mxu0 0.0
    %405 = vmatpush1.msra.mxu0 %v365
    %406 = vmatprep.subr.mxu0 0.0
    %407 = vmatpush1.msra.mxu0 %v366
    %408 = vmatprep.subr.mxu0 0.0
    %409 = vmatpush1.msra.mxu0 %v367
    %410 = vmatprep.subr.mxu0 0.0
    %411 = vmatpush1.msra.mxu0 %v368
    %412 = vmatprep.subr.mxu0 0.0
    %413 = vmatpush1.msra.mxu0 %v369
    %414 = vmatprep.subr.mxu0 0.0
    %415 = vmatpush1.msra.mxu0 %v370
    %416 = vmatprep.subr.mxu0 0.0
    %417 = vmatpush1.msra.mxu0 %v371
    %418 = vmatprep.subr.mxu0 0.0
    %419 = vmatpush1.msra.mxu0 %v372
    %420 = vmatprep.subr.mxu0 0.0
    %421 = vmatpush1.msra.mxu0 %v373
    %422 = vmatprep.subr.mxu0 0.0
    %423 = vmatpush1.msra.mxu0 %v374
    %424 = vmatprep.subr.mxu0 0.0
    %425 = vmatpush1.msra.mxu0 %v375
    %426 = vmatprep.subr.mxu0 0.0
    %427 = vmatpush1.msra.mxu0 %v392
    %428 = vmatprep.subr.mxu0 0.0
    %429 = vmatpush1.msra.mxu0 0.0
    %430 = vmatprep.subr.mxu0 0.0
    %431 = vmatpush1.msra.mxu0 0.0
    %432 = vmatprep.subr.mxu0 0.0
    %433 = vmatpush1.msra.mxu0 0.0
    %434 = vmatprep.subr.mxu0 0.0
    %435 = vmatpush1.msra.mxu0 0.0
    %436 = vmatprep.subr.mxu0 0.0
    %437 = vmatpush1.msra.mxu0 0.0
    %438 = vmatprep.subr.mxu0 0.0
    %439 = vmatpush1.msra.mxu0 0.0
    %440 = vmatprep.subr.mxu0 0.0
    %441 = vmatpush1.msra.mxu0 0.0
    %442 = vmatprep.subr.mxu0 0.0
    %443 = vmatpush1.msra.mxu0 0.0
    %444 = vmatprep.subr.mxu0 0.0
    %445 = vmatpush1.msra.mxu0 0.0
    %446 = vmatprep.subr.mxu0 0.0
    %447 = vmatpush1.msra.mxu0 0.0
    %448 = vmatprep.subr.mxu0 0.0
    %449 = vmatpush1.msra.mxu0 0.0
    %450 = vmatprep.subr.mxu0 0.0
    %451 = vmatpush1.msra.mxu0 0.0
    %452 = vmatprep.subr.mxu0 0.0
    %453 = vmatpush1.msra.mxu0 0.0
    %454 = vmatprep.subr.mxu0 0.0
    %455 = vmatpush1.msra.mxu0 0.0
    %456 = vmatprep.subr.mxu0 0.0
    %457 = vmatpush1.msra.mxu0 0.0
    %458 = vmatprep.mubr.f32.mxu0 %v379
    %459 = vmatmul.mubr.f32.gmra.mrb[0].mxu0 %v352
    %v460 = vpop.f32.mrb[0].mxu0
    %v461 = vadd.f32 0.0, %v460
    %v462 = vpop.f32.mrb[0].mxu0
    %463 = vmatprep.mubr.f32.mxu0 %v382
    %464 = vmatmul.mubr.f32.gmra.mrb[0].mxu0 %v354
    %v465 = vpop.f32.mrb[0].mxu0
    %v466 = vadd.f32 0.0, %v465
    %v467 = vpop.f32.mrb[0].mxu0
    %468 = vmatprep.mubr.f32.mxu0 %v385
    %469 = vmatmul.mubr.f32.gmra.mrb[0].mxu0 %v356
    %v470 = vpop.f32.mrb[0].mxu0
    %v471 = vadd.f32 0.0, %v470
    %v472 = vpop.f32.mrb[0].mxu0
    %473 = vmatprep.mubr.f32.mxu0 %v388
    %474 = vmatmul.mubr.f32.gmra.mrb[0].mxu0 %v358
    %v475 = vpop.f32.mrb[0].mxu0
    %v476 = vadd.f32 0.0, %v475
    %v477 = vpop.f32.mrb[0].mxu0
    %478 = vdwg.mxu0
    %s479 = sld [smem:[#allocation2]]
    %vm480 = vcmp.gt.f32.partialorder %v461, 0.0
    %vm481 = vcmp.gt.f32.partialorder %v466, 0.0
    %vm482 = vcmp.gt.f32.partialorder %v471, 0.0
    %vm483 = vcmp.gt.f32.partialorder %v476, 0.0
    %v484 = vsel %vm480, %v461, 1.0
    %v485 = vsel %vm481, %v466, 1.0
    %v486 = vsel %vm482, %v471, 1.0
    %v487 = vsel %vm483, %v476, 1.0
    %v488 = vlog2.pop %v484
    %v489 = vmul.f32 %v488, 0.6931472
    %v490 = vlog2.pop %v485
    %v491 = vmul.f32 %v490, 0.6931472
    %v492 = vlog2.pop %v486
    %v493 = vmul.f32 %v492, 0.6931472
    %v494 = vlog2.pop %v487
    %v495 = vmul.f32 %v494, 0.6931472
    %v496 = vstv %s479
    %v497 = vmul.f32 %v496, %v489
    %v498 = vmul.f32 %v496, %v491
    %v499 = vmul.f32 %v496, %v493
    %v500 = vmul.f32 %v496, %v495
    %v501 = vmul.f32 %v497, 1.442695
    %v502 = vpow.pop %v501
    %v503 = vmul.f32 %v498, 1.442695
    %v504 = vpow.pop %v503
    %v505 = vmul.f32 %v499, 1.442695
    %v506 = vpow.pop %v505
    %v507 = vmul.f32 %v500, 1.442695
    %v508 = vpow.pop %v507
    %v509 = vsel %vm480, %v502, 0.0
    %v510 = vsel %vm481, %v504, 0.0
    %v511 = vsel %vm482, %v506, 0.0
    %v512 = vsel %vm483, %v508, 0.0
    %v513 = vmul.f32 %v509, 0.999995
    %v514 = vmul.f32 %v510, 0.999995
    %v515 = vmul.f32 %v511, 0.999995
    %v516 = vmul.f32 %v512, 0.999995
    %vm517 = vcmask 261120
    %518 = vst.msk [vmem:[#allocation3] sm:$0xff] %vm517, %v513
    %519 = vst.msk [vmem:[#allocation3 + $0x8] sm:$0xff] %vm517, %v514
    %520 = vst.msk [vmem:[#allocation3 + $0x10] sm:$0xff] %vm517, %v515
    %vm521 = vcmask 254976
    %522 = vst.msk [vmem:[#allocation3 + $0x18] sm:$0x3] %vm521, %v516
    // Predicated region
    $region22: #{tpu_custom_call.1} parent=1 // pred_check
      _
    $region23: #{tpu_custom_call.1} parent=1 // pred_check_branch
      %524 = sbr.rel (0) target = $region25
    $region24: #{tpu_custom_call.1} parent=1 // pred_region
      %s526 = ssub.s32 512, 512
      %527 = vsyncadd [#allocation4], %s526
      %s528 = sshll.u32 [#allocation3], 4
      %s529 = int_to_ptr.vmem [resolvable:$true] %s528
      %534 = dma.vmem_to_hbm [thread:$0]  %s529, 512, %s5, [#allocation4], 128, 128, 8
    $region25: #{tpu_custom_call.1} parent=1 // pred_fallthru
      _
    // Predicated region
    $region26: #{tpu_custom_call.1} parent=1 // pred_check
      _
    $region27: #{tpu_custom_call.1} parent=1 // pred_check_branch
      %536 = sbr.rel (0) target = $region29
    $region28: #{tpu_custom_call.1} parent=1 // pred_region
      %537 = dma.done [#allocation4], 512
    $region29: #{tpu_custom_call.1} parent=1 // pred_fallthru
      _
    %538 = vsyncpa [#allocation4], 1

</llo_original>
